<compile_context>
chip_gen: v5e
topology: v5e:2x2
jax: 0.10.0
libtpu: 0.0.40
codegen_flags: <defaults>
</compile_context>

<pallas_src>
import math
import functools

import jax
import jax.numpy as jnp
from jax.experimental import pallas as pl
from jax.experimental.pallas import tpu as pltpu


_MiB = 1024 * 1024
_SQRT_HALF = 1.0 / math.sqrt(2.0)


def _erf(x):
    """Abramowitz & Stegun 7.1.26 rational approximation, |err| <= 1.5e-7."""
    a1, a2, a3, a4, a5 = (0.254829592, -0.284496736, 1.421413741,
                          -1.453152027, 1.061405429)
    p = 0.3275911
    ax = jnp.abs(x)
    t = 1.0 / (1.0 + p * ax)
    poly = ((((a5 * t + a4) * t + a3) * t + a2) * t + a1) * t
    y = 1.0 - poly * jnp.exp(-ax * ax)          # exp goes to the EUP slot
    return jnp.where(x >= 0.0, y, -y)


def _activation(name, x):
    if name == "gelu":        # erf-based gelu, matching the PyTorch module
        return x * 0.5 * (1.0 + _erf(x * _SQRT_HALF))
    if name == "relu":
        return jnp.maximum(x, 0.0)
    if name == "swish":
        return x * jax.nn.sigmoid(x)
    if name == "tanh":
        return jnp.tanh(x)
    if name == "sigmoid":
        return jax.nn.sigmoid(x)
    raise ValueError(f"unknown activation: {name}")


# ------------------------------ fused kernel -------------------------------

def _ffn_kernel(x_ref, w1_ref, b1_ref, w2_ref, b2_ref, g_ref, beta_ref,
                o_ref, acc_ref, *, act, eps):
    k = pl.program_id(1)

    @pl.when(k == 0)
    def _init():
        acc_ref[...] = jnp.zeros_like(acc_ref)

    x = x_ref[...]                                       # (TM, H), input dtype (f32)

    # dense_1 chunk + activation (intermediate stays in VMEM / vregs)
    h = jnp.dot(x.astype(w1_ref.dtype), w1_ref[...],
                preferred_element_type=jnp.float32) + b1_ref[...]
    h = _activation(act, h)

    # dense_2 chunk, accumulated in f32
    acc_ref[...] += jnp.dot(h.astype(w2_ref.dtype), w2_ref[...],
                            preferred_element_type=jnp.float32)

    @pl.when(k == pl.num_programs(1) - 1)
    def _finalize():
        # dropout is identity in eval mode; residual uses the f32 input
        z = acc_ref[...] + b2_ref[...] + x.astype(jnp.float32)
        mean = jnp.mean(z, axis=-1, keepdims=True)
        c = z - mean
        var = jnp.mean(c * c, axis=-1, keepdims=True)
        norm = c * jax.lax.rsqrt(var + eps)
        o_ref[...] = (norm * g_ref[...] + beta_ref[...]).astype(o_ref.dtype)


# ------------------------------ tiling helpers ------------------------------

def _round_up(x, m):
    return ((x + m - 1) // m) * m


def _sublane_multiple(cbytes):
    return {4: 8, 2: 16, 1: 32}.get(cbytes, 8)


def _vmem_capacity_bytes():
    try:
        return int(pltpu.get_tpu_info().vmem_capacity_bytes)
    except Exception:
        return 64 * _MiB            # conservative default (v7x per-TC VMEM)


def _vmem_bytes(tm, ti, nk, hidden, x_bytes, out_bytes, cbytes):
    nbuf_w = 1 if nk == 1 else 2                        # single-buffer resident weights
    b = 2 * tm * hidden * x_bytes                       # streamed x tile (double-buffered)
    b += 2 * tm * hidden * out_bytes                    # output tile (double-buffered)
    b += tm * hidden * 4                                # f32 accumulator scratch
    b += nbuf_w * (2 * hidden * ti * cbytes + ti * 4)   # W1 chunk, W2 chunk, b1 chunk
    b += 3 * hidden * 4                                 # b2, gamma, beta (Buffered(1))
    b += tm * ti * (4 + cbytes)                         # live (TM, TI) intermediate
    return b


def _plan_tiles(m, hidden, inner, x_bytes, out_bytes, cbytes, budget, inner_tile=None):
    s = _sublane_multiple(cbytes)
    tm_full = _round_up(max(m, 1), s)
    tm_cap = min(1024, tm_full)
    if tm_full > s:                 # keep >= 2 row tiles so both v7x TCs get work
        tm_cap = min(tm_cap, _round_up(pl.cdiv(m, 2), s))
    tm_cap = max(s, tm_cap)

    tms = []
    t = tm_cap
    while True:
        tms.append(t)
        if t <= s:
            break
        nxt = max(s, _round_up(t // 2, s))
        if nxt == t:
            break
        t = nxt

    def fits(tm, ti, nk):
        return _vmem_bytes(tm, ti, nk, hidden, x_bytes, out_bytes, cbytes) <= budget

    if inner_tile is not None:                  # explicit override (testing / tuning)
        ti = int(inner_tile)
        nk = pl.cdiv(inner, ti)
        for tm in tms:
            if fits(tm, ti, nk):
                return tm, ti
        return tms[-1], ti

    # 1) whole inner dim resident (weights fetched once, single-buffered)
    for tm in tms:
        if fits(tm, inner, 1):
            return tm, inner
    # 2) chunk the inner dim with lane-aligned (multiple-of-128) chunks
    for tm in tms:
        ti = (inner // 128) * 128
        while ti >= 128:
            if fits(tm, ti, 2):
                return tm, ti
            if ti <= 128:
                break
            ti = max(128, (ti // 256) * 128)
    return tms[-1], (128 if inner >= 128 else inner)    # last resort


# ------------------------------ public wrapper ------------------------------

def feed_forward(params, x, *, hidden_act="gelu", layer_norm_eps=1e-12,
                 compute_dtype=jnp.bfloat16, inner_tile=None):
    """x: (B, S, H) -> (B, S, H).  Matches FeedForward.forward in eval mode."""
    B, S, H = x.shape
    I = params["w1"].shape[1]
    M = B * S
    out_dtype = x.dtype

    x_bytes = jnp.dtype(x.dtype).itemsize
    out_bytes = jnp.dtype(out_dtype).itemsize
    cbytes = jnp.dtype(compute_dtype).itemsize

    capacity = _vmem_capacity_bytes()
    budget = max(8 * _MiB, min(int(0.80 * capacity), capacity - 12 * _MiB))

    TM, TI = _plan_tiles(M, H, I, x_bytes, out_bytes, cbytes, budget, inner_tile)

    # Pad the inner (I) dim of the weights with zeros when TI does not divide I.
    # Zero W2 rows contribute exactly zero regardless of the activation value,
    # so the result is unchanged.  (Weight-side only; activations are not padded.)
    I_pad = _round_up(I, TI)
    w1 = params["w1"].astype(compute_dtype)
    w2 = params["w2"].astype(compute_dtype)
    b1 = params["b1"].reshape(1, I).astype(jnp.float32)
    if I_pad != I:
        w1 = jnp.pad(w1, ((0, 0), (0, I_pad - I)))
        b1 = jnp.pad(b1, ((0, 0), (0, I_pad - I)))
        w2 = jnp.pad(w2, ((0, I_pad - I), (0, 0)))
    b2 = params["b2"].reshape(1, H).astype(jnp.float32)
    gamma = params["gamma"].reshape(1, H).astype(jnp.float32)
    beta = params["beta"].reshape(1, H).astype(jnp.float32)

    NK = I_pad // TI
    NM = pl.cdiv(M, TM)                 # ragged last row tile handled by Pallas masking

    x2 = x.reshape(M, H)                # no cast, no pad -> no extra HBM passes

    kernel = functools.partial(_ffn_kernel, act=hidden_act, eps=layer_norm_eps)

    resident = pl.Buffered(1)                       # fetched once, single-buffered
    w_mode = pl.Buffered(1) if NK == 1 else None    # stream (double-buffer) chunks if NK > 1

    def spec(shape, imap, mode=None):
        if mode is None:
            return pl.BlockSpec(shape, imap)
        return pl.BlockSpec(shape, imap, pipeline_mode=mode)

    in_specs = [
        pl.BlockSpec((TM, H), lambda i, k: (i, 0)),      # x tile (streamed per row tile)
        spec((H, TI), lambda i, k: (0, k), w_mode),      # W1 chunk
        spec((1, TI), lambda i, k: (0, k), w_mode),      # b1 chunk
        spec((TI, H), lambda i, k: (k, 0), w_mode),      # W2 chunk
        spec((1, H), lambda i, k: (0, 0), resident),     # b2
        spec((1, H), lambda i, k: (0, 0), resident),     # LayerNorm gamma
        spec((1, H), lambda i, k: (0, 0), resident),     # LayerNorm beta
    ]
    out_specs = pl.BlockSpec((TM, H), lambda i, k: (i, 0))

    est = _vmem_bytes(TM, TI, NK, H, x_bytes, out_bytes, cbytes)
    vmem_limit = int(min(capacity - 4 * _MiB, max(2 * est + 4 * _MiB, 16 * _MiB)))

    flops = 4 * M * H * I + 12 * M * (H + I)
    weight_bytes = 2 * H * I_pad * cbytes * (1 if NK == 1 else NM)
    bytes_accessed = (M * H * (x_bytes + out_bytes) + weight_bytes + (I_pad + 3 * H) * 4)
    cost = pl.CostEstimate(flops=int(flops),
                           transcendentals=int(M * I),
                           bytes_accessed=int(bytes_accessed))

    out = pl.pallas_call(
        kernel,
        out_shape=jax.ShapeDtypeStruct((M, H), out_dtype),
        grid_spec=pltpu.PrefetchScalarGridSpec(
            num_scalar_prefetch=0,
            grid=(NM, NK),
            in_specs=in_specs,
            out_specs=out_specs,
            scratch_shapes=[pltpu.VMEM((TM, H), jnp.float32)],
        ),
        compiler_params=pltpu.CompilerParams(
            dimension_semantics=("parallel", "arbitrary"),
            vmem_limit_bytes=vmem_limit,
        ),
        cost_estimate=cost,
    )(x2, w1, b1, w2, b2, gamma, beta)

    return out.reshape(B, S, H)


# ------------------------------ params / reference --------------------------

def init_feed_forward_params(key, hidden_size, inner_size):
    k1, k2, k3, k4 = jax.random.split(key, 4)
    bound1 = 1.0 / math.sqrt(hidden_size)
    bound2 = 1.0 / math.sqrt(inner_size)
    # weights stored (in, out) = transpose of torch's (out, in) nn.Linear weight
    return {
        "w1": jax.random.uniform(k1, (hidden_size, inner_size), jnp.float32, -bound1, bound1),
        "b1": jax.random.uniform(k2, (inner_size,), jnp.float32, -bound1, bound1),
        "w2": jax.random.uniform(k3, (inner_size, hidden_size), jnp.float32, -bound2, bound2),
        "b2": jax.random.uniform(k4, (hidden_size,), jnp.float32, -bound2, bound2),
        "gamma": jnp.ones((hidden_size,), jnp.float32),
        "beta": jnp.zeros((hidden_size,), jnp.float32),
    }


def _reference(params, x, hidden_act="gelu", layer_norm_eps=1e-12):
    h = x @ params["w1"] + params["b1"]
    if hidden_act == "gelu":
        h = h * 0.5 * (1.0 + jax.scipy.special.erf(h / math.sqrt(2.0)))
    elif hidden_act == "relu":
        h = jnp.maximum(h, 0.0)
    elif hidden_act == "swish":
        h = h * jax.nn.sigmoid(h)
    elif hidden_act == "tanh":
        h = jnp.tanh(h)
    elif hidden_act == "sigmoid":
        h = jax.nn.sigmoid(h)
    y = h @ params["w2"] + params["b2"]
    z = y + x
    mean = z.mean(-1, keepdims=True)
    var = ((z - mean) ** 2).mean(-1, keepdims=True)
    return (z - mean) / jnp.sqrt(var + layer_norm_eps) * params["gamma"] + params["beta"]


if __name__ == "__main__":
    hidden_size = 32
    inner_size = 64
    batch = 2
    seq = 8
    hidden_act = "gelu"
    layer_norm_eps = 1e-12
    # hidden_dropout_prob is irrelevant in eval mode (dropout == identity)

    root = jax.random.PRNGKey(0)
    k_params, k_x, k_params2 = jax.random.split(root, 3)
    params = init_feed_forward_params(k_params, hidden_size, inner_size)
    x = jax.random.normal(k_x, (batch, seq, hidden_size), dtype=jnp.float32)

    ref = _reference(params, x, hidden_act, layer_norm_eps)

    # 1) f32 compute path: must match the f32 reference to 1e-4
    out_f32 = jax.block_until_ready(
        feed_forward(params, x, hidden_act=hidden_act,
                     layer_norm_eps=layer_norm_eps, compute_dtype=jnp.float32))
    assert out_f32.shape == (batch, seq, hidden_size)
    assert jnp.allclose(out_f32, ref, atol=1e-4, rtol=1e-4), "f32 path mismatch"

    # 2) default bf16-matmul path (f32 accumulation, f32 residual + LayerNorm)
    out_bf16 = jax.block_until_ready(
        feed_forward(params, x, hidden_act=hidden_act, layer_norm_eps=layer_norm_eps))
    assert jnp.allclose(out_bf16, ref, atol=5e-2, rtol=5e-2), "bf16 path mismatch"

    # 3) forced inner-dim chunking (I=256, TI=128 -> NK=2) to exercise the
    #    accumulate-over-k reduction axis
    params2 = init_feed_forward_params(k_params2, hidden_size, 256)
    ref2 = _reference(params2, x, hidden_act, layer_norm_eps)
    out_chunk = jax.block_until_ready(
        feed_forward(params2, x, hidden_act=hidden_act, layer_norm_eps=layer_norm_eps,
                     compute_dtype=jnp.float32, inner_tile=128))
    assert jnp.allclose(out_chunk, ref2, atol=1e-4, rtol=1e-4), "chunked path mismatch"

    print("KERNEL_OK")
</pallas_src>

<mosaic_0001>
module attributes {stable_mosaic.version = 11 : i64} {
  func.func @_ffn_kernel(%arg0: i32, %arg1: i32, %arg2: memref<8x32xf32, #tpu.memory_space<vmem>>, %arg3: memref<32x64xf32, #tpu.memory_space<vmem>>, %arg4: memref<1x64xf32, #tpu.memory_space<vmem>>, %arg5: memref<64x32xf32, #tpu.memory_space<vmem>>, %arg6: memref<1x32xf32, #tpu.memory_space<vmem>>, %arg7: memref<1x32xf32, #tpu.memory_space<vmem>>, %arg8: memref<1x32xf32, #tpu.memory_space<vmem>>, %arg9: memref<8x32xf32, #tpu.memory_space<vmem>>, %arg10: memref<8x32xf32, #tpu.memory_space<vmem>>) attributes {dimension_semantics = [#tpu.dimension_semantics<parallel>, #tpu.dimension_semantics<arbitrary>], iteration_bounds = array<i64: 2, 1>, scalar_prefetch = 0 : i64, scratch_operands = 1 : i64, tpu.core_type = #tpu.core_type<tc>, window_params = [{transform_indices = @transform_0, window_bounds = array<i64: 8, 32>}, {pipeline_mode = #tpu.pipeline_mode<synchronous>, transform_indices = @transform_1, window_bounds = array<i64: 32, 64>}, {pipeline_mode = #tpu.pipeline_mode<synchronous>, transform_indices = @transform_2, window_bounds = array<i64: 1, 64>}, {pipeline_mode = #tpu.pipeline_mode<synchronous>, transform_indices = @transform_3, window_bounds = array<i64: 64, 32>}, {pipeline_mode = #tpu.pipeline_mode<synchronous>, transform_indices = @transform_4, window_bounds = array<i64: 1, 32>}, {pipeline_mode = #tpu.pipeline_mode<synchronous>, transform_indices = @transform_5, window_bounds = array<i64: 1, 32>}, {pipeline_mode = #tpu.pipeline_mode<synchronous>, transform_indices = @transform_6, window_bounds = array<i64: 1, 32>}, {transform_indices = @transform_7, window_bounds = array<i64: 8, 32>}]} {
    %c0_i32 = arith.constant 0 : i32
    %0 = arith.cmpi eq, %arg1, %c0_i32 : i32
    %1 = arith.extui %0 : i1 to i32
    %c0_i32_0 = arith.constant 0 : i32
    %2 = arith.cmpi ne, %1, %c0_i32_0 : i32
    scf.if %2 {
      %cst_30 = arith.constant 0.000000e+00 : f32
      %57 = vector.broadcast %cst_30 : f32 to vector<8x32xf32>
      %c0_31 = arith.constant 0 : index
      %c0_32 = arith.constant 0 : index
      %58 = vector.load %arg10[%c0_31, %c0_32] : memref<8x32xf32, #tpu.memory_space<vmem>>, vector<8x32xf32>
      tpu.vector_store %arg10[%c0_31, %c0_32], %57 {strides = array<i32>} : memref<8x32xf32, #tpu.memory_space<vmem>>, vector<8x32xf32>,
    } else {
    }
    %c0 = arith.constant 0 : index
    %c0_1 = arith.constant 0 : index
    %3 = vector.load %arg2[%c0, %c0_1] : memref<8x32xf32, #tpu.memory_space<vmem>>, vector<8x32xf32>
    %c0_2 = arith.constant 0 : index
    %c0_3 = arith.constant 0 : index
    %4 = vector.load %arg3[%c0_2, %c0_3] : memref<32x64xf32, #tpu.memory_space<vmem>>, vector<32x64xf32>
    %cst = arith.constant dense<0.000000e+00> : vector<8x64xf32>
    %5 = tpu.matmul %3, %4, %cst {dimension_numbers = #tpu.dot_dimension_numbers<[1], [0], [0], [1], [0, 0, 1, 1], [], []>} : vector<8x32xf32>, vector<32x64xf32>, vector<8x64xf32> -> vector<8x64xf32>
    %c0_4 = arith.constant 0 : index
    %c0_5 = arith.constant 0 : index
    %6 = vector.load %arg4[%c0_4, %c0_5] : memref<1x64xf32, #tpu.memory_space<vmem>>, vector<1x64xf32>
    %7 = vector.broadcast %6 : vector<1x64xf32> to vector<8x64xf32>
    %8 = arith.addf %5, %7 : vector<8x64xf32>
    %cst_6 = arith.constant 5.000000e-01 : f32
    %9 = vector.broadcast %cst_6 : f32 to vector<8x64xf32>
    %10 = arith.mulf %8, %9 : vector<8x64xf32>
    %cst_7 = arith.constant 0.707106769 : f32
    %11 = vector.broadcast %cst_7 : f32 to vector<8x64xf32>
    %12 = arith.mulf %8, %11 : vector<8x64xf32>
    %13 = math.absf %12 : vector<8x64xf32>
    %cst_8 = arith.constant 0.327591091 : f32
    %14 = vector.broadcast %cst_8 : f32 to vector<8x64xf32>
    %15 = arith.mulf %14, %13 : vector<8x64xf32>
    %cst_9 = arith.constant 1.000000e+00 : f32
    %16 = vector.broadcast %cst_9 : f32 to vector<8x64xf32>
    %17 = arith.addf %16, %15 : vector<8x64xf32>
    %cst_10 = arith.constant 1.000000e+00 : f32
    %18 = vector.broadcast %cst_10 : f32 to vector<8x64xf32>
    %19 = arith.divf %18, %17 : vector<8x64xf32>
    %cst_11 = arith.constant 1.06140542 : f32
    %20 = vector.broadcast %cst_11 : f32 to vector<8x64xf32>
    %21 = arith.mulf %20, %19 : vector<8x64xf32>
    %cst_12 = arith.constant -1.45315206 : f32
    %22 = vector.broadcast %cst_12 : f32 to vector<8x64xf32>
    %23 = arith.addf %21, %22 : vector<8x64xf32>
    %24 = arith.mulf %23, %19 : vector<8x64xf32>
    %cst_13 = arith.constant 1.42141378 : f32
    %25 = vector.broadcast %cst_13 : f32 to vector<8x64xf32>
    %26 = arith.addf %24, %25 : vector<8x64xf32>
    %27 = arith.mulf %26, %19 : vector<8x64xf32>
    %cst_14 = arith.constant -0.284496725 : f32
    %28 = vector.broadcast %cst_14 : f32 to vector<8x64xf32>
    %29 = arith.addf %27, %28 : vector<8x64xf32>
    %30 = arith.mulf %29, %19 : vector<8x64xf32>
    %cst_15 = arith.constant 0.254829586 : f32
    %31 = vector.broadcast %cst_15 : f32 to vector<8x64xf32>
    %32 = arith.addf %30, %31 : vector<8x64xf32>
    %33 = arith.mulf %32, %19 : vector<8x64xf32>
    %cst_16 = arith.constant 0.000000e+00 : f32
    %34 = vector.broadcast %cst_16 : f32 to vector<8x64xf32>
    %35 = arith.subf %34, %13 : vector<8x64xf32>
    %36 = arith.mulf %35, %13 : vector<8x64xf32>
    %37 = math.exp %36 : vector<8x64xf32>
    %38 = arith.mulf %33, %37 : vector<8x64xf32>
    %cst_17 = arith.constant 1.000000e+00 : f32
    %39 = vector.broadcast %cst_17 : f32 to vector<8x64xf32>
    %40 = arith.subf %39, %38 : vector<8x64xf32>
    %cst_18 = arith.constant 0.000000e+00 : f32
    %41 = vector.broadcast %cst_18 : f32 to vector<8x64xf32>
    %42 = arith.cmpf oge, %12, %41 : vector<8x64xf32>
    %cst_19 = arith.constant 0.000000e+00 : f32
    %43 = vector.broadcast %cst_19 : f32 to vector<8x64xf32>
    %44 = arith.subf %43, %40 : vector<8x64xf32>
    %45 = arith.select %42, %40, %44 : vector<8x64xi1>, vector<8x64xf32>
    %cst_20 = arith.constant 1.000000e+00 : f32
    %46 = vector.broadcast %cst_20 : f32 to vector<8x64xf32>
    %47 = arith.addf %46, %45 : vector<8x64xf32>
    %48 = arith.mulf %10, %47 : vector<8x64xf32>
    %c0_21 = arith.constant 0 : index
    %c0_22 = arith.constant 0 : index
    %49 = vector.load %arg10[%c0_21, %c0_22] : memref<8x32xf32, #tpu.memory_space<vmem>>, vector<8x32xf32>
    %c0_23 = arith.constant 0 : index
    %c0_24 = arith.constant 0 : index
    %50 = vector.load %arg5[%c0_23, %c0_24] : memref<64x32xf32, #tpu.memory_space<vmem>>, vector<64x32xf32>
    %cst_25 = arith.constant dense<0.000000e+00> : vector<8x32xf32>
    %51 = tpu.matmul %48, %50, %cst_25 {dimension_numbers = #tpu.dot_dimension_numbers<[1], [0], [0], [1], [0, 0, 1, 1], [], []>} : vector<8x64xf32>, vector<64x32xf32>, vector<8x32xf32> -> vector<8x32xf32>
    %52 = arith.addf %49, %51 : vector<8x32xf32>
    %c0_26 = arith.constant 0 : index
    %c0_27 = arith.constant 0 : index
    %53 = vector.load %arg10[%c0_26, %c0_27] : memref<8x32xf32, #tpu.memory_space<vmem>>, vector<8x32xf32>
    tpu.vector_store %arg10[%c0_26, %c0_27], %52 {strides = array<i32>} : memref<8x32xf32, #tpu.memory_space<vmem>>, vector<8x32xf32>,
    %c0_i32_28 = arith.constant 0 : i32
    %54 = arith.cmpi eq, %arg1, %c0_i32_28 : i32
    %55 = arith.extui %54 : i1 to i32
    %c0_i32_29 = arith.constant 0 : i32
    %56 = arith.cmpi ne, %55, %c0_i32_29 : i32
    scf.if %56 {
      %c0_30 = arith.constant 0 : index
      %c0_31 = arith.constant 0 : index
      %57 = vector.load %arg10[%c0_30, %c0_31] : memref<8x32xf32, #tpu.memory_space<vmem>>, vector<8x32xf32>
      %c0_32 = arith.constant 0 : index
      %c0_33 = arith.constant 0 : index
      %58 = vector.load %arg6[%c0_32, %c0_33] : memref<1x32xf32, #tpu.memory_space<vmem>>, vector<1x32xf32>
      %59 = vector.broadcast %58 : vector<1x32xf32> to vector<8x32xf32>
      %60 = arith.addf %57, %59 : vector<8x32xf32>
      %61 = arith.addf %60, %3 : vector<8x32xf32>
      %cst_34 = arith.constant dense<0.000000e+00> : vector<8xf32>
      %62 = vector.multi_reduction <add>, %61, %cst_34 [1] : vector<8x32xf32> to vector<8xf32>
      %63 = vector.shape_cast %62 : vector<8xf32> to vector<8x1xf32>
      %cst_35 = arith.constant 3.200000e+01 : f32
      %64 = vector.broadcast %cst_35 : f32 to vector<8x1xf32>
      %65 = arith.divf %63, %64 : vector<8x1xf32>
      %66 = vector.broadcast %65 : vector<8x1xf32> to vector<8x32xf32>
      %67 = arith.subf %61, %66 : vector<8x32xf32>
      %68 = arith.mulf %67, %67 : vector<8x32xf32>
      %cst_36 = arith.constant dense<0.000000e+00> : vector<8xf32>
      %69 = vector.multi_reduction <add>, %68, %cst_36 [1] : vector<8x32xf32> to vector<8xf32>
      %70 = vector.shape_cast %69 : vector<8xf32> to vector<8x1xf32>
      %cst_37 = arith.constant 3.200000e+01 : f32
      %71 = vector.broadcast %cst_37 : f32 to vector<8x1xf32>
      %72 = arith.divf %70, %71 : vector<8x1xf32>
      %cst_38 = arith.constant 9.99999996E-13 : f32
      %73 = vector.broadcast %cst_38 : f32 to vector<8x1xf32>
      %74 = arith.addf %72, %73 : vector<8x1xf32>
      %75 = math.rsqrt %74 : vector<8x1xf32>
      %76 = vector.broadcast %75 : vector<8x1xf32> to vector<8x32xf32>
      %77 = arith.mulf %67, %76 : vector<8x32xf32>
      %c0_39 = arith.constant 0 : index
      %c0_40 = arith.constant 0 : index
      %78 = vector.load %arg7[%c0_39, %c0_40] : memref<1x32xf32, #tpu.memory_space<vmem>>, vector<1x32xf32>
      %79 = vector.broadcast %78 : vector<1x32xf32> to vector<8x32xf32>
      %80 = arith.mulf %77, %79 : vector<8x32xf32>
      %c0_41 = arith.constant 0 : index
      %c0_42 = arith.constant 0 : index
      %81 = vector.load %arg8[%c0_41, %c0_42] : memref<1x32xf32, #tpu.memory_space<vmem>>, vector<1x32xf32>
      %82 = vector.broadcast %81 : vector<1x32xf32> to vector<8x32xf32>
      %83 = arith.addf %80, %82 : vector<8x32xf32>
      %c0_43 = arith.constant 0 : index
      %c0_44 = arith.constant 0 : index
      %84 = vector.load %arg9[%c0_43, %c0_44] : memref<8x32xf32, #tpu.memory_space<vmem>>, vector<8x32xf32>
      tpu.vector_store %arg9[%c0_43, %c0_44], %83 {strides = array<i32>} : memref<8x32xf32, #tpu.memory_space<vmem>>, vector<8x32xf32>,
    } else {
    }
    return
  }
  func.func @transform_0(%arg0: i32, %arg1: i32) -> (i32, i32) {
    %c0_i32 = arith.constant 0 : i32
    %c0_i32_0 = arith.constant 0 : i32
    return %arg0, %c0_i32 : i32, i32
  }
  func.func @transform_1(%arg0: i32, %arg1: i32) -> (i32, i32) {
    %c0_i32 = arith.constant 0 : i32
    %c0_i32_0 = arith.constant 0 : i32
    return %c0_i32, %arg1 : i32, i32
  }
  func.func @transform_2(%arg0: i32, %arg1: i32) -> (i32, i32) {
    %c0_i32 = arith.constant 0 : i32
    %c0_i32_0 = arith.constant 0 : i32
    return %c0_i32, %arg1 : i32, i32
  }
  func.func @transform_3(%arg0: i32, %arg1: i32) -> (i32, i32) {
    %c0_i32 = arith.constant 0 : i32
    %c0_i32_0 = arith.constant 0 : i32
    return %arg1, %c0_i32 : i32, i32
  }
  func.func @transform_4(%arg0: i32, %arg1: i32) -> (i32, i32) {
    %c0_i32 = arith.constant 0 : i32
    %c0_i32_0 = arith.constant 0 : i32
    %c0_i32_1 = arith.constant 0 : i32
    return %c0_i32, %c0_i32_0 : i32, i32
  }
  func.func @transform_5(%arg0: i32, %arg1: i32) -> (i32, i32) {
    %c0_i32 = arith.constant 0 : i32
    %c0_i32_0 = arith.constant 0 : i32
    %c0_i32_1 = arith.constant 0 : i32
    return %c0_i32, %c0_i32_0 : i32, i32
  }
  func.func @transform_6(%arg0: i32, %arg1: i32) -> (i32, i32) {
    %c0_i32 = arith.constant 0 : i32
    %c0_i32_0 = arith.constant 0 : i32
    %c0_i32_1 = arith.constant 0 : i32
    return %c0_i32, %c0_i32_0 : i32, i32
  }
  func.func @transform_7(%arg0: i32, %arg1: i32) -> (i32, i32) {
    %c0_i32 = arith.constant 0 : i32
    %c0_i32_0 = arith.constant 0 : i32
    return %arg0, %c0_i32 : i32, i32
  }
}

</mosaic_0001>

<llo_original>
// kernel: tpu_custom_call.1
$region0: #{tpu_custom_call.1}
  #allocation0 [shape = 'u32[]', space=smem, size = 0x4, offset = 0x4, fixed_abs, tag = 'smem constant byte address 0x4 - core index']
  #allocation1 [shape = 'u32[72,128]{1,0:T(1,128)}', space=vmem, size = 0x9000, scoped, tag = 'internal scratch']
  #allocation2 [shape = 'f32[8,32]{1,0:T(8,128)}', space=vmem, size = 0x1000, scoped, tag = 'scratch operand']
  %s0 = inlined_call_operand.vmem [shape: f32[16,32], index: 0, kind: input, shape index: {}]
  %s1 = inlined_call_operand.vmem [shape: f32[32,64], index: 1, kind: input, shape index: {}]
  %s2 = inlined_call_operand.vmem [shape: f32[1,64], index: 2, kind: input, shape index: {}]
  %s3 = inlined_call_operand.vmem [shape: f32[64,32], index: 3, kind: input, shape index: {}]
  %s4 = inlined_call_operand.vmem [shape: f32[1,32], index: 4, kind: input, shape index: {}]
  %s5 = inlined_call_operand.vmem [shape: f32[1,32], index: 5, kind: input, shape index: {}]
  %s6 = inlined_call_operand.vmem [shape: f32[1,32], index: 6, kind: input, shape index: {}]
  %s7 = inlined_call_operand.hbm [shape: f32[16,32], index: 7, kind: output, shape index: {}]
  %s8 = sld [smem:[#allocation0]]
  $region69: #{tpu_custom_call.1} parent=0
    _
  %s10 = ssub.s32 1, %s8
  %s11 = scalar_select 0, %s10, %s8
  $region1: #{tpu_custom_call.1} parent=0
    #allocation3 [shape = 'u8[8192]{0}', space=vmem, size = 0x2000, scoped, tag = 'output window, operand 0']
    #allocation4 [shape = 's32[2]{0}', space=sflag, size = 0x8, scoped, tag = 'scoped memory for tpu_custom_call.1']
    %12 = vsyncpa [#allocation4], 0
    %s13 = scalar_lea.sflag [#allocation4], 1
    %14 = vsyncpa %s13, 0
    loop: start=0, step=1, limit=4
    $region2: #{tpu_custom_call.1} parent=1 // loop_pre_header
      _
    $region3: #{tpu_custom_call.1} parent=1 // loop_header
      %s16 = sphi 0, %s20
      %p17 = scmp.ge.s32.totalorder %s16, 4
      %s23 = sphi 0, %s35
      %s24 = sphi 0, %s31
      %s25 = sphi 0, %s23
      %s26 = sphi 0, %s24
      %s27 = sphi 0, %s25
      %s28 = sphi 0, %s26
      %s38 = sphi 0, %s40
      %s41 = sphi 0, %s38
      %s42 = sphi 0, %s41
      %s58 = sphi 0, %s42
      %s64 = sphi 0, %s66
      %s67 = sphi 0, %s64
      %s68 = sphi 0, %s67
      %s84 = sphi 0, %s68
      %s90 = sphi 0, %s92
      %s93 = sphi 0, %s90
      %s94 = sphi 0, %s93
      %s110 = sphi 0, %s94
      %s116 = sphi 0, %s118
      %s119 = sphi 0, %s116
      %s120 = sphi 0, %s119
      %s136 = sphi 0, %s120
      %s140 = sphi 0, %s140
      %s142 = sphi 0, %s140
      %s143 = sphi 0, %s142
      %s157 = sphi 0, %s143
      %s161 = sphi 0, %s161
      %s163 = sphi 0, %s161
      %s164 = sphi 0, %s163
      %s178 = sphi 0, %s164
      %s182 = sphi 0, %s182
      %s184 = sphi 0, %s182
      %s185 = sphi 0, %s184
      %s199 = sphi 0, %s185
      %s205 = sphi 0, %s207
      %s208 = sphi 0, %s205
      %s209 = sphi 0, %s208
      %s225 = sphi 0, %s209
    $region4: #{tpu_custom_call.1} parent=1 // loop_header_branch
      %19 = sbr.rel (%p17) target = $region8
    $region5: #{tpu_custom_call.1} parent=1 // loop_body
      %s21 = ssub.s32 %s16, 1
      %s22 = ssub.s32 %s16, 2
      %s29 = sadd.s32 1, %s24
      %p30 = scmp.ge.s32.totalorder %s29, 1
      %s31 = scalar_select %p30, 0, %s29
      %s32 = sadd.s32 1, %s23
      %s33 = scalar_select %p30, %s32, %s23
      %p34 = scmp.ge.s32.totalorder %s33, 2
      %s35 = scalar_select %p34, 0, %s33
      %s36 = ssub.s32 %s23, %s35
      %p37 = scmp.eq.s32.totalorder %s36, 0
      %s39 = sadd.s32 %s38, 1
      %s40 = scalar_select %p37, %s38, %s39
      %p43 = pneg %p37
      %p44 = scmp.eq.s32.totalorder %s16, 1
      %p45 = por %p43, %p44
      %p46 = scmp.ne.s32.totalorder %s38, %s41
      %p47 = scmp.eq.s32.totalorder %s16, 0
      %p48 = por %p46, %p47
      %p49 = scmp.ne.s32.totalorder %s38, %s41
      %p50 = scmp.eq.s32.totalorder %s21, 1
      %p51 = por %p49, %p50
      %p52 = scmp.ne.s32.totalorder %s41, %s42
      %p53 = scmp.eq.s32.totalorder %s21, 0
      %p54 = por %p52, %p53
      %p55 = scmp.ne.s32.totalorder %s41, %s42
      %p56 = scmp.eq.s32.totalorder %s22, 1
      %p57 = por %p55, %p56
      %p59 = scmp.ne.s32.totalorder %s42, %s58
      %p60 = scmp.eq.s32.totalorder %s22, 0
      %p61 = por %p59, %p60
      %s62 = ssub.s32 %s24, %s31
      %p63 = scmp.eq.s32.totalorder %s62, 0
      %s65 = sadd.s32 %s64, 1
      %s66 = scalar_select %p63, %s64, %s65
      %p69 = pneg %p63
      %p70 = scmp.eq.s32.totalorder %s16, 1
      %p71 = por %p69, %p70
      %p72 = scmp.ne.s32.totalorder %s64, %s67
      %p73 = scmp.eq.s32.totalorder %s16, 0
      %p74 = por %p72, %p73
      %p75 = scmp.ne.s32.totalorder %s64, %s67
      %p76 = scmp.eq.s32.totalorder %s21, 1
      %p77 = por %p75, %p76
      %p78 = scmp.ne.s32.totalorder %s67, %s68
      %p79 = scmp.eq.s32.totalorder %s21, 0
      %p80 = por %p78, %p79
      %p81 = scmp.ne.s32.totalorder %s67, %s68
      %p82 = scmp.eq.s32.totalorder %s22, 1
      %p83 = por %p81, %p82
      %p85 = scmp.ne.s32.totalorder %s68, %s84
      %p86 = scmp.eq.s32.totalorder %s22, 0
      %p87 = por %p85, %p86
      %s88 = ssub.s32 %s24, %s31
      %p89 = scmp.eq.s32.totalorder %s88, 0
      %s91 = sadd.s32 %s90, 1
      %s92 = scalar_select %p89, %s90, %s91
      %p95 = pneg %p89
      %p96 = scmp.eq.s32.totalorder %s16, 1
      %p97 = por %p95, %p96
      %p98 = scmp.ne.s32.totalorder %s90, %s93
      %p99 = scmp.eq.s32.totalorder %s16, 0
      %p100 = por %p98, %p99
      %p101 = scmp.ne.s32.totalorder %s90, %s93
      %p102 = scmp.eq.s32.totalorder %s21, 1
      %p103 = por %p101, %p102
      %p104 = scmp.ne.s32.totalorder %s93, %s94
      %p105 = scmp.eq.s32.totalorder %s21, 0
      %p106 = por %p104, %p105
      %p107 = scmp.ne.s32.totalorder %s93, %s94
      %p108 = scmp.eq.s32.totalorder %s22, 1
      %p109 = por %p107, %p108
      %p111 = scmp.ne.s32.totalorder %s94, %s110
      %p112 = scmp.eq.s32.totalorder %s22, 0
      %p113 = por %p111, %p112
      %s114 = ssub.s32 %s24, %s31
      %p115 = scmp.eq.s32.totalorder %s114, 0
      %s117 = sadd.s32 %s116, 1
      %s118 = scalar_select %p115, %s116, %s117
      %p121 = pneg %p115
      %p122 = scmp.eq.s32.totalorder %s16, 1
      %p123 = por %p121, %p122
      %p124 = scmp.ne.s32.totalorder %s116, %s119
      %p125 = scmp.eq.s32.totalorder %s16, 0
      %p126 = por %p124, %p125
      %p127 = scmp.ne.s32.totalorder %s116, %s119
      %p128 = scmp.eq.s32.totalorder %s21, 1
      %p129 = por %p127, %p128
      %p130 = scmp.ne.s32.totalorder %s119, %s120
      %p131 = scmp.eq.s32.totalorder %s21, 0
      %p132 = por %p130, %p131
      %p133 = scmp.ne.s32.totalorder %s119, %s120
      %p134 = scmp.eq.s32.totalorder %s22, 1
      %p135 = por %p133, %p134
      %p137 = scmp.ne.s32.totalorder %s120, %s136
      %p138 = scmp.eq.s32.totalorder %s22, 0
      %p139 = por %p137, %p138
      %s141 = sadd.s32 %s140, 1
      %p144 = scmp.eq.s32.totalorder %s16, 1
      %p145 = scmp.ne.s32.totalorder %s140, %s142
      %p146 = scmp.eq.s32.totalorder %s16, 0
      %p147 = por %p145, %p146
      %p148 = scmp.ne.s32.totalorder %s140, %s142
      %p149 = scmp.eq.s32.totalorder %s21, 1
      %p150 = por %p148, %p149
      %p151 = scmp.ne.s32.totalorder %s142, %s143
      %p152 = scmp.eq.s32.totalorder %s21, 0
      %p153 = por %p151, %p152
      %p154 = scmp.ne.s32.totalorder %s142, %s143
      %p155 = scmp.eq.s32.totalorder %s22, 1
      %p156 = por %p154, %p155
      %p158 = scmp.ne.s32.totalorder %s143, %s157
      %p159 = scmp.eq.s32.totalorder %s22, 0
      %p160 = por %p158, %p159
      %s162 = sadd.s32 %s161, 1
      %p165 = scmp.eq.s32.totalorder %s16, 1
      %p166 = scmp.ne.s32.totalorder %s161, %s163
      %p167 = scmp.eq.s32.totalorder %s16, 0
      %p168 = por %p166, %p167
      %p169 = scmp.ne.s32.totalorder %s161, %s163
      %p170 = scmp.eq.s32.totalorder %s21, 1
      %p171 = por %p169, %p170
      %p172 = scmp.ne.s32.totalorder %s163, %s164
      %p173 = scmp.eq.s32.totalorder %s21, 0
      %p174 = por %p172, %p173
      %p175 = scmp.ne.s32.totalorder %s163, %s164
      %p176 = scmp.eq.s32.totalorder %s22, 1
      %p177 = por %p175, %p176
      %p179 = scmp.ne.s32.totalorder %s164, %s178
      %p180 = scmp.eq.s32.totalorder %s22, 0
      %p181 = por %p179, %p180
      %s183 = sadd.s32 %s182, 1
      %p186 = scmp.eq.s32.totalorder %s16, 1
      %p187 = scmp.ne.s32.totalorder %s182, %s184
      %p188 = scmp.eq.s32.totalorder %s16, 0
      %p189 = por %p187, %p188
      %p190 = scmp.ne.s32.totalorder %s182, %s184
      %p191 = scmp.eq.s32.totalorder %s21, 1
      %p192 = por %p190, %p191
      %p193 = scmp.ne.s32.totalorder %s184, %s185
      %p194 = scmp.eq.s32.totalorder %s21, 0
      %p195 = por %p193, %p194
      %p196 = scmp.ne.s32.totalorder %s184, %s185
      %p197 = scmp.eq.s32.totalorder %s22, 1
      %p198 = por %p196, %p197
      %p200 = scmp.ne.s32.totalorder %s185, %s199
      %p201 = scmp.eq.s32.totalorder %s22, 0
      %p202 = por %p200, %p201
      %s203 = ssub.s32 %s23, %s35
      %p204 = scmp.eq.s32.totalorder %s203, 0
      %s206 = sadd.s32 %s205, 1
      %s207 = scalar_select %p204, %s205, %s206
      %p210 = pneg %p204
      %p211 = scmp.eq.s32.totalorder %s16, 1
      %p212 = por %p210, %p211
      %p213 = scmp.ne.s32.totalorder %s205, %s208
      %p214 = scmp.eq.s32.totalorder %s16, 0
      %p215 = por %p213, %p214
      %p216 = scmp.ne.s32.totalorder %s205, %s208
      %p217 = scmp.eq.s32.totalorder %s21, 1
      %p218 = por %p216, %p217
      %p219 = scmp.ne.s32.totalorder %s208, %s209
      %p220 = scmp.eq.s32.totalorder %s21, 0
      %p221 = por %p219, %p220
      %p222 = scmp.ne.s32.totalorder %s208, %s209
      %p223 = scmp.eq.s32.totalorder %s22, 1
      %p224 = por %p222, %p223
      %p226 = scmp.ne.s32.totalorder %s209, %s225
      %p227 = scmp.eq.s32.totalorder %s22, 0
      %p228 = por %p226, %p227
      %p229 = scmp.le.s32.totalorder 1, %s16
      %p230 = scmp.lt.s32.totalorder %s16, 3
      %p231 = pnand %p229, %p230
      %p232 = pneg %p231
      // Predicated region
      $region9: #{tpu_custom_call.1} parent=5 // pred_check
        _
      $region10: #{tpu_custom_call.1} parent=5 // pred_check_branch
        %234 = sbr.rel (%p231) target = $region12
      $region11: #{tpu_custom_call.1} parent=5 // pred_region
        %s235 = ssub.s32 %s16, 1
        // Predicated region
        $region13: #{tpu_custom_call.1} parent=11 // pred_check
          %p236 = pneg %p80
        $region14: #{tpu_custom_call.1} parent=11 // pred_check_branch
          %238 = sbr.rel (%p236) target = $region16
        $region15: #{tpu_custom_call.1} parent=11 // pred_region
          %p239 = scmp.lt.s32.totalorder %s26, 0
          %s240 = scalar_select %p239, %s26, 0
          %s241 = smul.addr %s240, 8
          %s242 = scalar_lea.vmem %s1, %s241
        $region16: #{tpu_custom_call.1} parent=11 // pred_fallthru
          _
        // Predicated region
        $region17: #{tpu_custom_call.1} parent=11 // pred_check
          %p243 = pneg %p106
        $region18: #{tpu_custom_call.1} parent=11 // pred_check_branch
          %245 = sbr.rel (%p243) target = $region20
        $region19: #{tpu_custom_call.1} parent=11 // pred_region
          %p246 = scmp.lt.s32.totalorder %s26, 0
          %s247 = scalar_select %p246, %s26, 0
          %s248 = scalar_lea.vmem %s2, %s247
        $region20: #{tpu_custom_call.1} parent=11 // pred_fallthru
          _
        // Predicated region
        $region21: #{tpu_custom_call.1} parent=11 // pred_check
          %p249 = pneg %p132
        $region22: #{tpu_custom_call.1} parent=11 // pred_check_branch
          %251 = sbr.rel (%p249) target = $region24
        $region23: #{tpu_custom_call.1} parent=11 // pred_region
          %s252 = smul.u32 8, %s26
          %p253 = scmp.lt.s32.totalorder %s252, 7
          %s254 = scalar_select %p253, %s252, 7
          %s255 = smul.addr %s254, 8
          %s256 = scalar_lea.vmem %s3, %s255
          %s257 = smul.u32 8, %s26
        $region24: #{tpu_custom_call.1} parent=11 // pred_fallthru
          _
        // Predicated region
        $region25: #{tpu_custom_call.1} parent=11 // pred_check
          %p258 = pneg %p153
        $region26: #{tpu_custom_call.1} parent=11 // pred_check_branch
          %260 = sbr.rel (%p258) target = $region28
        $region27: #{tpu_custom_call.1} parent=11 // pred_region
          _
        $region28: #{tpu_custom_call.1} parent=11 // pred_fallthru
          _
        // Predicated region
        $region29: #{tpu_custom_call.1} parent=11 // pred_check
          %p261 = pneg %p174
        $region30: #{tpu_custom_call.1} parent=11 // pred_check_branch
          %263 = sbr.rel (%p261) target = $region32
        $region31: #{tpu_custom_call.1} parent=11 // pred_region
          _
        $region32: #{tpu_custom_call.1} parent=11 // pred_fallthru
          _
        // Predicated region
        $region33: #{tpu_custom_call.1} parent=11 // pred_check
          %p264 = pneg %p195
        $region34: #{tpu_custom_call.1} parent=11 // pred_check_branch
          %266 = sbr.rel (%p264) target = $region36
        $region35: #{tpu_custom_call.1} parent=11 // pred_region
          _
        $region36: #{tpu_custom_call.1} parent=11 // pred_fallthru
          _
      $region12: #{tpu_custom_call.1} parent=5 // pred_fallthru
        _
      %p267 = scmp.lt.s32.totalorder %s16, 2
      // Predicated region
      $region37: #{tpu_custom_call.1} parent=5 // pred_check
        %p268 = pneg %p267
      $region38: #{tpu_custom_call.1} parent=5 // pred_check_branch
        %270 = sbr.rel (%p268) target = $region40
      $region39: #{tpu_custom_call.1} parent=5 // pred_region
        // Predicated region
        $region41: #{tpu_custom_call.1} parent=39 // pred_check
          %p271 = pneg %p48
        $region42: #{tpu_custom_call.1} parent=39 // pred_check_branch
          %273 = sbr.rel (%p271) target = $region44
        $region43: #{tpu_custom_call.1} parent=39 // pred_region
          %p274 = scmp.lt.s32.totalorder %s23, 1
          %s275 = scalar_select %p274, %s23, 1
          %s276 = smul.addr %s275, 8
          %s277 = scalar_lea.vmem %s0, %s276
        $region44: #{tpu_custom_call.1} parent=39 // pred_fallthru
          _
      $region40: #{tpu_custom_call.1} parent=5 // pred_fallthru
        _
      %p278 = scmp.le.s32.totalorder 1, %s16
      %p279 = scmp.lt.s32.totalorder %s16, 3
      %p280 = pnand %p278, %p279
      %p281 = pneg %p280
      // Predicated region
      $region45: #{tpu_custom_call.1} parent=5 // pred_check
        _
      $region46: #{tpu_custom_call.1} parent=5 // pred_check_branch
        %283 = sbr.rel (%p280) target = $region48
      $region47: #{tpu_custom_call.1} parent=5 // pred_region
        %s284 = ssub.s32 %s16, 1
        %p285 = scmp.lt.s32.totalorder %s25, 1
        %s286 = scalar_select %p285, %s25, 1
        %s287 = smul.addr %s286, 8
        %s288 = scalar_lea.vmem %s0, %s287
        %p289 = pneg %p54
        %p290 = pneg %p51
        %p291 = scmp.lt.s32.totalorder %s26, 0
        %s292 = scalar_select %p291, %s26, 0
        %s293 = smul.addr %s292, 8
        %s294 = scalar_lea.vmem %s1, %s293
        %p295 = pneg %p80
        %p296 = pneg %p77
        %p297 = scmp.lt.s32.totalorder %s26, 0
        %s298 = scalar_select %p297, %s26, 0
        %s299 = scalar_lea.vmem %s2, %s298
        %p300 = pneg %p106
        %p301 = pneg %p103
        %s302 = smul.u32 8, %s26
        %p303 = scmp.lt.s32.totalorder %s302, 7
        %s304 = scalar_select %p303, %s302, 7
        %s305 = smul.addr %s304, 8
        %s306 = scalar_lea.vmem %s3, %s305
        %p307 = pneg %p132
        %p308 = pneg %p129
        %p309 = pneg %p153
        %p310 = pneg %p150
        %p311 = pneg %p174
        %p312 = pneg %p171
        %p313 = pneg %p195
        %p314 = pneg %p192
        %p315 = pneg %p221
        %p316 = pneg %p218
        %s317 = sand.u32 %s208, 1
        %s318 = scalar_lea.sflag [#allocation4], %s317
        %s319 = sand.u32 %s208, 1
        %s320 = smul.addr %s319, 8
        %s321 = scalar_lea.vmem [#allocation3], %s320
        %p322 = scmp.lt.s32.totalorder %s25, 1
        %s323 = scalar_select %p322, %s25, 1
        %s324 = smul.addr %s323, 8
        %s325 = scalar_lea.vmem %s0, %s324
        %p326 = scmp.lt.s32.totalorder %s26, 0
        %s327 = scalar_select %p326, %s26, 0
        %s328 = smul.addr %s327, 8
        %s329 = scalar_lea.vmem %s1, %s328
        %p330 = scmp.lt.s32.totalorder %s26, 0
        %s331 = scalar_select %p330, %s26, 0
        %s332 = scalar_lea.vmem %s2, %s331
        %s333 = smul.u32 8, %s26
        %p334 = scmp.lt.s32.totalorder %s333, 7
        %s335 = scalar_select %p334, %s333, 7
        %s336 = smul.addr %s335, 8
        %s337 = scalar_lea.vmem %s3, %s336
        %s338 = smul.u32 8, %s26
        %p339 = scmp.eq.s32.totalorder %s26, 0
        // Predicated region
        $region49: #{tpu_custom_call.1} parent=47 // pred_check
          %p340 = pneg %p339
        $region50: #{tpu_custom_call.1} parent=47 // pred_check_branch
          %342 = sbr.rel (%p340) target = $region52
        $region51: #{tpu_custom_call.1} parent=47 // pred_region
          %vm343 = vcmask 261120
          %344 = vst.msk [vmem:[#allocation2] sm:$0xff] %vm343, 0.0
        $region52: #{tpu_custom_call.1} parent=47 // pred_fallthru
          _
        %v345 = vld [vmem:[%s325] sm:$0xff]
        %v346 = vld [vmem:[%s329] sm:$0xff]
        %v347 = vld [vmem:[%s329 + $0x8] sm:$0xff]
        %v348 = vld [vmem:[%s329 + $0x10] sm:$0xff]
        %v349 = vld [vmem:[%s329 + $0x18] sm:$0xff]
        %v350 = vld [vmem:[%s332] sm:$0x1]
        %v352 = vperm.slane %v350, 0
        %vm354 = vcmask 261120
        %v356 = vsel %vm354, %v345, 0
        %358 = vmatpush.msra.mxu0 0.0
        %359 = vmatpush.msra.mxu0 0.0
        %360 = vmatpush.msra.mxu0 0.0
        %361 = vmatpush.msra.mxu0 0.0
        %362 = vmatpush.msra.mxu0 0.0
        %363 = vmatpush.msra.mxu0 0.0
        %364 = vmatpush.msra.mxu0 0.0
        %365 = vmatpush.msra.mxu0 0.0
        %366 = vmatpush.msra.mxu0 0.0
        %367 = vmatpush.msra.mxu0 0.0
        %368 = vmatpush.msra.mxu0 0.0
        %369 = vmatpush.msra.mxu0 0.0
        %370 = vmatpush.msra.mxu0 %v349
        %371 = vmatpush.msra.mxu0 %v348
        %372 = vmatpush.msra.mxu0 %v347
        %373 = vmatpush.msra.mxu0 %v346
        %374 = vmatmul.f32.gmra.mxu0 %v356
        %v375 = vpop.f32.mrf.mxu0
        %v376 = vadd.f32 %v352, %v375
        %377 = vdwg.mxu0
        %v378 = vmul.f32 %v376, 0.5
        %v379 = vmul.f32 %v376, 0.70710677
        %v380 = vand.u32 2147483647, %v379
        %v381 = vmul.f32 %v380, 0.3275911
        %v382 = vadd.f32 %v381, 1.0
        %v383 = vrcp.pop %v382
        %v384 = vmul.f32 %v382, %v383
        %v385 = vsub.f32 1.0, %v384
        %v386 = vmul.f32 %v383, %v385
        %v387 = vadd.f32 %v383, %v386
        %vm388 = vweird.f32 %v382
        %vm389 = vweird.f32 %v383
        %vm390 = vmor %vm388, %vm389
        %v391 = vsel %vm390, %v383, %v387
        %v392 = vand.u32 2147483647, %v382
        %vm393 = vcmp.eq.f32.partialorder %v392, 8.507059e+37
        %v394 = vand.u32 %v382, 2147483648
        %v395 = vor.u32 1.1754944e-38, %v394
        %v396 = vsel %vm393, %v395, %v391
        %v397 = vmul.f32 1.0, %v396
        %v398 = vmul.f32 %v397, 1.0614054
        %v399 = vadd.f32 %v398, -1.4531521
        %v400 = vmul.f32 %v399, %v397
        %v401 = vadd.f32 %v400, 1.4214138
        %v402 = vmul.f32 %v401, %v397
        %v403 = vadd.f32 %v402, -0.28449672
        %v404 = vmul.f32 %v403, %v397
        %v405 = vadd.f32 %v404, 0.2548296
        %v406 = vmul.f32 %v405, %v397
        %v407 = vsub.f32 0.0, %v380
        %v408 = vmul.f32 %v407, %v380
        %v409 = vmul.f32 %v408, 1.442695
        %v410 = vpow.pop %v409
        %v411 = vmul.f32 %v406, %v410
        %v412 = vsub.f32 1.0, %v411
        %vm413 = vcmp.ge.f32.partialorder %v379, 0.0
        %v414 = vsub.f32 0.0, %v412
        %v415 = vsel %vm413, %v412, %v414
        %v416 = vadd.f32 %v415, 1.0
        %v417 = vmul.f32 %v378, %v416
        %v418 = vld [vmem:[#allocation2] sm:$0xff]
        %v419 = vld [vmem:[%s337] sm:$0xff]
        %v420 = vld [vmem:[%s337 + $0x8] sm:$0xff]
        %v421 = vld [vmem:[%s337 + $0x10] sm:$0xff]
        %v422 = vld [vmem:[%s337 + $0x18] sm:$0xff]
        %v423 = vld [vmem:[%s337 + $0x20] sm:$0xff]
        %v424 = vld [vmem:[%s337 + $0x28] sm:$0xff]
        %v425 = vld [vmem:[%s337 + $0x30] sm:$0xff]
        %v426 = vld [vmem:[%s337 + $0x38] sm:$0xff]
        %vm427 = vcmask 523264
        %v429 = vsel %vm427, %v417, 0
        %431 = vmatpush.msra.mxu0 0.0
        %432 = vmatpush.msra.mxu0 0.0
        %433 = vmatpush.msra.mxu0 0.0
        %434 = vmatpush.msra.mxu0 0.0
        %435 = vmatpush.msra.mxu0 0.0
        %436 = vmatpush.msra.mxu0 0.0
        %437 = vmatpush.msra.mxu0 0.0
        %438 = vmatpush.msra.mxu0 0.0
        %439 = vmatpush.msra.mxu0 %v426
        %440 = vmatpush.msra.mxu0 %v425
        %441 = vmatpush.msra.mxu0 %v424
        %442 = vmatpush.msra.mxu0 %v423
        %443 = vmatpush.msra.mxu0 %v422
        %444 = vmatpush.msra.mxu0 %v421
        %445 = vmatpush.msra.mxu0 %v420
        %446 = vmatpush.msra.mxu0 %v419
        %447 = vmatmul.f32.gmra.mxu0 %v429
        %v448 = vpop.f32.mrf.mxu0
        %v449 = vadd.f32 0.0, %v448
        %450 = vdwg.mxu0
        %v451 = vadd.f32 %v418, %v449
        %452 = vst.msk [vmem:[#allocation2] sm:$0xff] %vm354, %v451
        // Predicated region
        $region53: #{tpu_custom_call.1} parent=47 // pred_check
          %p453 = pneg %p339
        $region54: #{tpu_custom_call.1} parent=47 // pred_check_branch
          %455 = sbr.rel (%p453) target = $region56
        $region55: #{tpu_custom_call.1} parent=47 // pred_region
          %v456 = vld [vmem:[#allocation2] sm:$0xff]
          %v457 = vld [vmem:[%s4] sm:$0x1]
          %v459 = vperm.slane %v457, 0
          %v461 = vadd.f32 %v456, %v459
          %v462 = vadd.f32 %v461, %v345
          %v463 = vsel %vm354, %v462, 0.0
          %464 = vadd.xlane.f32.xlu0 %v463
          %v465 = vpop.xlane.xlu0 %464
          %v466 = vrcp.pop 32.0
          %v467 = vmul.f32 32.0, %v466
          %v468 = vsub.f32 1.0, %v467
          %v469 = vmul.f32 %v466, %v468
          %v470 = vadd.f32 %v466, %v469
          %vm471 = vweird.f32 %v466
          %v472 = vsel %vm471, %v466, %v470
          %v473 = vmul.f32 %v465, %v472
          %v474 = vsub.f32 %v462, %v473
          %v475 = vmul.f32 %v474, %v474
          %v476 = vsel %vm354, %v475, 0.0
          %477 = vadd.xlane.f32.xlu0 %v476
          %v478 = vpop.xlane.xlu0 %477
          %v479 = vmul.f32 %v478, %v472
          %v480 = vadd.f32 %v479, 1e-12
          %v481 = vrsqrt.pop %v480
          %v482 = vmul.f32 %v481, %v480
          %v483 = vmul.f32 %v482, %v481
          %v484 = vmul.f32 0.5, %v483
          %v485 = vsub.f32 1.5, %v484
          %v486 = vmul.f32 %v481, %v485
          %vm487 = vweird.f32 %v480
          %vm488 = vweird.f32 %v481
          %vm489 = vmor %vm487, %vm488
          %v490 = vsel %vm489, %v481, %v486
          %v491 = vmul.f32 %v474, %v490
          %v492 = vld [vmem:[%s5] sm:$0x1]
          %v494 = vperm.slane %v492, 0
          %v496 = vmul.f32 %v491, %v494
          %v497 = vld [vmem:[%s6] sm:$0x1]
          %v499 = vperm.slane %v497, 0
          %v501 = vadd.f32 %v496, %v499
          %502 = vst.msk [vmem:[%s321] sm:$0xff] %vm354, %v501
        $region56: #{tpu_custom_call.1} parent=47 // pred_fallthru
          _
        %s503 = sand.u32 %s208, 1
        %s504 = scalar_lea.sflag [#allocation4], %s503
        %s505 = sand.u32 %s208, 1
        %s506 = smul.addr %s505, 8
        %s507 = scalar_lea.vmem [#allocation3], %s506
        // Predicated region
        $region57: #{tpu_custom_call.1} parent=47 // pred_check
          %p508 = pneg %p218
        $region58: #{tpu_custom_call.1} parent=47 // pred_check_branch
          %510 = sbr.rel (%p508) target = $region60
        $region59: #{tpu_custom_call.1} parent=47 // pred_region
          %512 = vsyncadd %s504, 0
          %s513 = smul.addr %s25, 8
          %s514 = scalar_lea.hbm %s7, %s513
          %s516 = sshll.u32 %s507, 4
          %s517 = int_to_ptr.vmem [resolvable:$true] %s516
          %s518 = sshll.u32 %s514, 4
          %s519 = int_to_ptr.hbm [resolvable:$true] %s518
          %521 = dma.vmem_to_hbm [thread:$0]  %s517, 128, %s519, %s504
        $region60: #{tpu_custom_call.1} parent=47 // pred_fallthru
          _
      $region48: #{tpu_custom_call.1} parent=5 // pred_fallthru
        _
      %p522 = scmp.le.s32.totalorder 2, %s16
      // Predicated region
      $region61: #{tpu_custom_call.1} parent=5 // pred_check
        %p523 = pneg %p522
      $region62: #{tpu_custom_call.1} parent=5 // pred_check_branch
        %525 = sbr.rel (%p523) target = $region64
      $region63: #{tpu_custom_call.1} parent=5 // pred_region
        %s526 = ssub.s32 %s16, 2
        // Predicated region
        $region65: #{tpu_custom_call.1} parent=63 // pred_check
          %p527 = pneg %p224
        $region66: #{tpu_custom_call.1} parent=63 // pred_check_branch
          %529 = sbr.rel (%p527) target = $region68
        $region67: #{tpu_custom_call.1} parent=63 // pred_region
          %s530 = sand.u32 %s209, 1
          %s531 = scalar_lea.sflag [#allocation4], %s530
          %s532 = sand.u32 %s209, 1
          %s533 = smul.addr %s532, 8
          %s534 = scalar_lea.vmem [#allocation3], %s533
          %536 = dma.done %s531, 128
        $region68: #{tpu_custom_call.1} parent=63 // pred_fallthru
          _
      $region64: #{tpu_custom_call.1} parent=5 // pred_fallthru
        _
    $region6: #{tpu_custom_call.1} parent=1 // loop_footer
      %s20 = sadd.s32 1, %s16
    $region7: #{tpu_custom_call.1} parent=1 // loop_footer_branch
      %15 = sbr.rel target = $region3
    $region8: #{tpu_custom_call.1} parent=1 // loop_exit
      _
    %537 = vsyncpa [#allocation4], 1
    %s538 = scalar_lea.sflag [#allocation4], 1
    %539 = vsyncpa %s538, 1

</llo_original>
